<compile_context>
chip_gen: v6e
topology: v6e:2x2x1
jax: 0.10.0
libtpu: 0.0.40
codegen_flags: <defaults>
</compile_context>

<pallas_src>
import math
import functools

import jax
import jax.numpy as jnp
from jax import lax
from jax.experimental import pallas as pl
from jax.experimental.pallas import tpu as pltpu


def _round_up(x, m):
    return (x + m - 1) // m * m


def _sdpa_body(q_ref, k_ref, v_ref, mask_ref, out_ref, attn_ref, *, scale, lk_valid):
    q = q_ref[0]                       # (TQ, D)   input dtype
    k = k_ref[0]                       # (Lk, D)
    v = v_ref[0]                       # (Lk, Dv)

    if scale:
        # Scale the small (TQ, D) q tile once instead of the (TQ, Lk) scores.
        q = q * q.dtype.type(1.0 / math.sqrt(q.shape[-1]))

    # scores = q @ k^T, contracting on D without materializing k.T (MXU).
    # bf16 inputs hit the MXU bf16 fast path; accumulation is always f32.
    s = lax.dot_general(q, k, (((1,), (1,)), ((), ())),
                        preferred_element_type=jnp.float32)    # (TQ, Lk) f32

    if mask_ref is not None:
        m = mask_ref[0]                                        # (TQ, Lk) int8, nonzero = masked
        s = jnp.where(m != 0, jnp.float32(-1e9), s)

    if lk_valid is not None:
        # Neutralize zero-padded key columns (lk_valid is a compile-time constant).
        col = lax.broadcasted_iota(jnp.int32, s.shape, 1)
        s = jnp.where(col < lk_valid, s, -jnp.inf)

    # Numerically-stable softmax over the key axis (dim=2 of the full tensor).
    s_max = jnp.max(s, axis=-1, keepdims=True)
    e = jnp.exp(s - s_max)
    denom = jnp.sum(e, axis=-1, keepdims=True)
    p = e * pl.reciprocal(denom, approx=True)                  # (TQ, Lk) f32

    # TODO(synk): dropout on the attention weights is not implemented (inference path).

    out = jnp.dot(p.astype(v.dtype), v, preferred_element_type=jnp.float32)  # (TQ, Dv)

    attn_ref[0] = p.astype(attn_ref.dtype)
    out_ref[0] = out.astype(out_ref.dtype)


def _sdpa_kernel_nomask(q_ref, k_ref, v_ref, out_ref, attn_ref, *, scale, lk_valid):
    _sdpa_body(q_ref, k_ref, v_ref, None, out_ref, attn_ref, scale=scale, lk_valid=lk_valid)


def _sdpa_kernel_mask(q_ref, k_ref, v_ref, mask_ref, out_ref, attn_ref, *, scale, lk_valid):
    _sdpa_body(q_ref, k_ref, v_ref, mask_ref, out_ref, attn_ref, scale=scale, lk_valid=lk_valid)


def scaled_dot_product_attention(q, k, v, mask=None, scale=True):
    """q: (B, Lq, D), k: (B, Lk, D), v: (B, Lk, Dv), mask: optional (B, Lq, Lk)
    bool/int (nonzero = masked).  Returns (output (B, Lq, Dv), attn (B, Lq, Lk))."""
    B, Lq, D = q.shape
    Bk, Lk, Dk = k.shape
    Bv, Lkv, Dv = v.shape
    assert Bk == B and Bv == B and Dk == D and Lkv == Lk

    # ---- q tiling and (8, 128)-friendly padded sequence lengths ----------
    if Lq <= 512:
        TQ = _round_up(Lq, 8)          # single q tile per batch element
    else:
        TQ = 256
    Lq_p = _round_up(Lq, TQ)
    Lk_p = _round_up(Lk, 128)          # lane-dense attn stores

    qp = q if Lq_p == Lq else jnp.pad(q, ((0, 0), (0, Lq_p - Lq), (0, 0)))
    kp = k if Lk_p == Lk else jnp.pad(k, ((0, 0), (0, Lk_p - Lk), (0, 0)))
    vp = v if Lk_p == Lk else jnp.pad(v, ((0, 0), (0, Lk_p - Lk), (0, 0)))

    use_mask = mask is not None
    operands = [qp, kp, vp]
    in_specs = [
        pl.BlockSpec((1, TQ, D), lambda b, qi: (b, qi, 0)),
        pl.BlockSpec((1, Lk_p, D), lambda b, qi: (b, 0, 0)),    # resident across q tiles
        pl.BlockSpec((1, Lk_p, Dv), lambda b, qi: (b, 0, 0)),
    ]
    if use_mask:
        mp = mask.astype(jnp.int8)     # 4x less mask DMA than int32
        if Lq_p != Lq or Lk_p != Lk:
            mp = jnp.pad(mp, ((0, 0), (0, Lq_p - Lq), (0, Lk_p - Lk)))
        operands.append(mp)
        in_specs.append(pl.BlockSpec((1, TQ, Lk_p), lambda b, qi: (b, qi, 0)))

    lk_valid = None if Lk_p == Lk else Lk
    kernel_fn = _sdpa_kernel_mask if use_mask else _sdpa_kernel_nomask
    kernel = functools.partial(kernel_fn, scale=scale, lk_valid=lk_valid)

    attn_dtype = q.dtype               # attn writeback in input dtype

    # ---- explicit scoped-VMEM budget (kept <= 48 MiB: safe on v7x's 64 MiB)
    isz = jnp.dtype(q.dtype).itemsize
    block_bytes = (
        (TQ * D + Lk_p * D + Lk_p * Dv + TQ * Dv) * isz
        + TQ * Lk_p * jnp.dtype(attn_dtype).itemsize
        + (TQ * Lk_p if use_mask else 0)
        + TQ * Lk_p * 4                # in-kernel f32 score/prob temporaries
    )
    vmem_limit = int(max(32 << 20, min(3 * block_bytes, 48 << 20)))

    out, attn = pl.pallas_call(
        kernel,
        out_shape=(
            jax.ShapeDtypeStruct((B, Lq_p, Dv), q.dtype),
            jax.ShapeDtypeStruct((B, Lq_p, Lk_p), attn_dtype),
        ),
        grid_spec=pltpu.PrefetchScalarGridSpec(
            num_scalar_prefetch=0,
            grid=(B, Lq_p // TQ),
            in_specs=in_specs,
            out_specs=(
                pl.BlockSpec((1, TQ, Dv), lambda b, qi: (b, qi, 0)),
                pl.BlockSpec((1, TQ, Lk_p), lambda b, qi: (b, qi, 0)),
            ),
        ),
        compiler_params=pltpu.CompilerParams(
            dimension_semantics=("parallel", "parallel"),
            vmem_limit_bytes=vmem_limit,
        ),
    )(*operands)

    if Lq_p != Lq or Lk_p != Lk:
        out = out[:, :Lq, :]
        attn = attn[:, :Lq, :Lk]
    return out, attn


def _reference(q, k, v, mask=None, scale=True):
    attn = jnp.einsum("bqd,bkd->bqk", q, k)
    if scale:
        attn = attn / math.sqrt(k.shape[-1])
    if mask is not None:
        attn = jnp.where(mask, -1e9, attn)
    attn = jax.nn.softmax(attn, axis=2)
    out = jnp.einsum("bqk,bkd->bqd", attn, v)
    return out, attn


if __name__ == "__main__":
    key = jax.random.PRNGKey(0)
    kq, kk, kv, km = jax.random.split(key, 4)

    B, Lq, Lk, D, Dv = 2, 8, 8, 32, 32
    q = jax.random.normal(kq, (B, Lq, D), dtype=jnp.float32)
    k = jax.random.normal(kk, (B, Lk, D), dtype=jnp.float32)
    v = jax.random.normal(kv, (B, Lk, Dv), dtype=jnp.float32)

    # Unmasked path (no dummy-mask traffic at all).
    out, attn = scaled_dot_product_attention(q, k, v, mask=None, scale=True)
    out = jax.block_until_ready(out)
    attn = jax.block_until_ready(attn)
    ref_out, ref_attn = _reference(q, k, v, mask=None, scale=True)
    assert jnp.allclose(out, ref_out, atol=2e-3, rtol=2e-3)
    assert jnp.allclose(attn, ref_attn, atol=2e-3, rtol=2e-3)

    # Masked path (int8 mask, nonzero = masked).
    mask = jax.random.bernoulli(km, p=0.3, shape=(B, Lq, Lk))
    out_m, attn_m = scaled_dot_product_attention(q, k, v, mask=mask, scale=True)
    out_m = jax.block_until_ready(out_m)
    attn_m = jax.block_until_ready(attn_m)
    ref_out_m, ref_attn_m = _reference(q, k, v, mask=mask, scale=True)
    assert jnp.allclose(out_m, ref_out_m, atol=2e-3, rtol=2e-3)
    assert jnp.allclose(attn_m, ref_attn_m, atol=2e-3, rtol=2e-3)

    print("KERNEL_OK")
</pallas_src>

<mosaic_0001>
module attributes {stable_mosaic.version = 11 : i64} {
  func.func @_sdpa_kernel_nomask(%arg0: i32, %arg1: i32, %arg2: memref<1x8x32xf32, #tpu.memory_space<vmem>>, %arg3: memref<1x128x32xf32, #tpu.memory_space<vmem>>, %arg4: memref<1x128x32xf32, #tpu.memory_space<vmem>>, %arg5: memref<1x8x32xf32, #tpu.memory_space<vmem>>, %arg6: memref<1x8x128xf32, #tpu.memory_space<vmem>>) attributes {dimension_semantics = [#tpu.dimension_semantics<parallel>, #tpu.dimension_semantics<parallel>], iteration_bounds = array<i64: 2, 1>, scalar_prefetch = 0 : i64, scratch_operands = 0 : i64, tpu.core_type = #tpu.core_type<tc>, window_params = [{transform_indices = @transform_0, window_bounds = array<i64: 1, 8, 32>}, {transform_indices = @transform_1, window_bounds = array<i64: 1, 128, 32>}, {transform_indices = @transform_2, window_bounds = array<i64: 1, 128, 32>}, {transform_indices = @transform_3, window_bounds = array<i64: 1, 8, 32>}, {transform_indices = @transform_4, window_bounds = array<i64: 1, 8, 128>}]} {
    %c0 = arith.constant 0 : index
    %c0_0 = arith.constant 0 : index
    %c0_1 = arith.constant 0 : index
    %0 = vector.load %arg2[%c0, %c0_0, %c0_1] : memref<1x8x32xf32, #tpu.memory_space<vmem>>, vector<1x8x32xf32>
    %1 = vector.shape_cast %0 : vector<1x8x32xf32> to vector<8x32xf32>
    %c0_2 = arith.constant 0 : index
    %c0_3 = arith.constant 0 : index
    %c0_4 = arith.constant 0 : index
    %2 = vector.load %arg3[%c0_2, %c0_3, %c0_4] : memref<1x128x32xf32, #tpu.memory_space<vmem>>, vector<1x128x32xf32>
    %3 = vector.shape_cast %2 : vector<1x128x32xf32> to vector<128x32xf32>
    %c0_5 = arith.constant 0 : index
    %c0_6 = arith.constant 0 : index
    %c0_7 = arith.constant 0 : index
    %4 = vector.load %arg4[%c0_5, %c0_6, %c0_7] : memref<1x128x32xf32, #tpu.memory_space<vmem>>, vector<1x128x32xf32>
    %5 = vector.shape_cast %4 : vector<1x128x32xf32> to vector<128x32xf32>
    %cst = arith.constant 0.176776692 : f32
    %6 = vector.broadcast %cst : f32 to vector<8x32xf32>
    %7 = arith.mulf %1, %6 : vector<8x32xf32>
    %cst_8 = arith.constant dense<0.000000e+00> : vector<8x128xf32>
    %8 = tpu.matmul %7, %3, %cst_8 {dimension_numbers = #tpu.dot_dimension_numbers<[1], [1], [0], [0], [0, 0, 1, 0], [], []>} : vector<8x32xf32>, vector<128x32xf32>, vector<8x128xf32> -> vector<8x128xf32>
    %9 = tpu.iota {dimensions = array<i32: 1>} : vector<8x128xi32>
    %c8_i32 = arith.constant 8 : i32
    %10 = vector.broadcast %c8_i32 : i32 to vector<8x128xi32>
    %11 = arith.cmpi slt, %9, %10 : vector<8x128xi32>
    %cst_9 = arith.constant 0xFF800000 : f32
    %12 = vector.broadcast %cst_9 : f32 to vector<8x128xf32>
    %13 = arith.select %11, %8, %12 : vector<8x128xi1>, vector<8x128xf32>
    %cst_10 = arith.constant dense<0xFF800000> : vector<8xf32>
    %14 = vector.multi_reduction <maximumf>, %13, %cst_10 [1] : vector<8x128xf32> to vector<8xf32>
    %15 = vector.shape_cast %14 : vector<8xf32> to vector<8x1xf32>
    %16 = vector.broadcast %15 : vector<8x1xf32> to vector<8x128xf32>
    %17 = arith.subf %13, %16 : vector<8x128xf32>
    %18 = math.exp %17 : vector<8x128xf32>
    %cst_11 = arith.constant dense<0.000000e+00> : vector<8xf32>
    %19 = vector.multi_reduction <add>, %18, %cst_11 [1] : vector<8x128xf32> to vector<8xf32>
    %20 = vector.shape_cast %19 : vector<8xf32> to vector<8x1xf32>
    %21 = tpu.reciprocal %20 {approx = true} : vector<8x1xf32> -> vector<8x1xf32>
    %22 = vector.broadcast %21 : vector<8x1xf32> to vector<8x128xf32>
    %23 = arith.mulf %18, %22 : vector<8x128xf32>
    %cst_12 = arith.constant dense<0.000000e+00> : vector<8x32xf32>
    %24 = tpu.matmul %23, %5, %cst_12 {dimension_numbers = #tpu.dot_dimension_numbers<[1], [0], [0], [1], [0, 0, 1, 1], [], []>} : vector<8x128xf32>, vector<128x32xf32>, vector<8x32xf32> -> vector<8x32xf32>
    %c0_13 = arith.constant 0 : index
    %c0_14 = arith.constant 0 : index
    %c0_15 = arith.constant 0 : index
    %25 = vector.load %arg6[%c0_13, %c0_14, %c0_15] : memref<1x8x128xf32, #tpu.memory_space<vmem>>, vector<1x8x128xf32>
    %26 = vector.shape_cast %25 : vector<1x8x128xf32> to vector<8x128xf32>
    %27 = vector.shape_cast %23 : vector<8x128xf32> to vector<1x8x128xf32>
    tpu.vector_store %arg6[%c0_13, %c0_14, %c0_15], %27 {strides = array<i32>} : memref<1x8x128xf32, #tpu.memory_space<vmem>>, vector<1x8x128xf32>,
    %c0_16 = arith.constant 0 : index
    %c0_17 = arith.constant 0 : index
    %c0_18 = arith.constant 0 : index
    %28 = vector.load %arg5[%c0_16, %c0_17, %c0_18] : memref<1x8x32xf32, #tpu.memory_space<vmem>>, vector<1x8x32xf32>
    %29 = vector.shape_cast %28 : vector<1x8x32xf32> to vector<8x32xf32>
    %30 = vector.shape_cast %24 : vector<8x32xf32> to vector<1x8x32xf32>
    tpu.vector_store %arg5[%c0_16, %c0_17, %c0_18], %30 {strides = array<i32>} : memref<1x8x32xf32, #tpu.memory_space<vmem>>, vector<1x8x32xf32>,
    return
  }
  func.func @transform_0(%arg0: i32, %arg1: i32) -> (i32, i32, i32) {
    %c0_i32 = arith.constant 0 : i32
    %c0_i32_0 = arith.constant 0 : i32
    return %arg0, %arg1, %c0_i32 : i32, i32, i32
  }
  func.func @transform_1(%arg0: i32, %arg1: i32) -> (i32, i32, i32) {
    %c0_i32 = arith.constant 0 : i32
    %c0_i32_0 = arith.constant 0 : i32
    %c0_i32_1 = arith.constant 0 : i32
    return %arg0, %c0_i32, %c0_i32_0 : i32, i32, i32
  }
  func.func @transform_2(%arg0: i32, %arg1: i32) -> (i32, i32, i32) {
    %c0_i32 = arith.constant 0 : i32
    %c0_i32_0 = arith.constant 0 : i32
    %c0_i32_1 = arith.constant 0 : i32
    return %arg0, %c0_i32, %c0_i32_0 : i32, i32, i32
  }
  func.func @transform_3(%arg0: i32, %arg1: i32) -> (i32, i32, i32) {
    %c0_i32 = arith.constant 0 : i32
    %c0_i32_0 = arith.constant 0 : i32
    return %arg0, %arg1, %c0_i32 : i32, i32, i32
  }
  func.func @transform_4(%arg0: i32, %arg1: i32) -> (i32, i32, i32) {
    %c0_i32 = arith.constant 0 : i32
    %c0_i32_0 = arith.constant 0 : i32
    return %arg0, %arg1, %c0_i32 : i32, i32, i32
  }
}

</mosaic_0001>

<llo_original>
// kernel: tpu_custom_call.1
$region0: #{tpu_custom_call.1}
  #allocation0 [shape = 'u32[]', space=smem, size = 0x4, offset = 0x4, fixed_abs, tag = 'smem constant byte address 0x4 - core index']
  #allocation1 [shape = 'u32[144,128]{1,0:T(1,128)}', space=vmem, size = 0x12000, scoped, tag = 'internal scratch']
  %s0 = inlined_call_operand.vmem [shape: f32[2,8,32], index: 0, kind: input, shape index: {}]
  %s1 = inlined_call_operand.vmem [shape: f32[2,128,32], index: 1, kind: input, shape index: {}]
  %s2 = inlined_call_operand.vmem [shape: f32[2,128,32], index: 2, kind: input, shape index: {}]
  %s3 = inlined_call_operand.hbm [shape: f32[2,8,32], index: 3, kind: output, shape index: {0}]
  %s4 = inlined_call_operand.hbm [shape: f32[2,8,128], index: 4, kind: output, shape index: {1}]
  %5 = xla_tuple %s3, %s4
  %s6 = sld [smem:[#allocation0]]
  $region53: #{tpu_custom_call.1} parent=0
    _
  %s8 = ssub.s32 1, %s6
  %s9 = scalar_select 0, %s8, %s6
  $region1: #{tpu_custom_call.1} parent=0
    #allocation2 [shape = 'u8[8192]{0}', space=vmem, size = 0x2000, scoped, tag = 'output window, operand 0']
    #allocation3 [shape = 's32[2]{0}', space=sflag, size = 0x8, scoped, tag = 'scoped memory for tpu_custom_call.1']
    #allocation4 [shape = 'u8[8192]{0}', space=vmem, size = 0x2000, scoped, tag = 'output window, operand 1']
    #allocation5 [shape = 's32[2]{0}', space=sflag, size = 0x8, scoped, tag = 'scoped memory for tpu_custom_call.1']
    %10 = vsyncpa [#allocation3], 0
    %s11 = scalar_lea.sflag [#allocation3], 1
    %12 = vsyncpa %s11, 0
    %13 = vsyncpa [#allocation5], 0
    %s14 = scalar_lea.sflag [#allocation5], 1
    %15 = vsyncpa %s14, 0
    loop: start=0, step=1, limit=4
    $region2: #{tpu_custom_call.1} parent=1 // loop_pre_header
      _
    $region3: #{tpu_custom_call.1} parent=1 // loop_header
      %s17 = sphi 0, %s21
      %p18 = scmp.ge.s32.totalorder %s17, 4
      %s24 = sphi 0, %s36
      %s25 = sphi 0, %s32
      %s26 = sphi 0, %s24
      %s27 = sphi 0, %s25
      %s28 = sphi 0, %s26
      %s29 = sphi 0, %s27
      %s41 = sphi 0, %s43
      %s44 = sphi 0, %s41
      %s45 = sphi 0, %s44
      %s61 = sphi 0, %s45
      %s67 = sphi 0, %s69
      %s70 = sphi 0, %s67
      %s71 = sphi 0, %s70
      %s87 = sphi 0, %s71
      %s93 = sphi 0, %s95
      %s96 = sphi 0, %s93
      %s97 = sphi 0, %s96
      %s113 = sphi 0, %s97
      %s121 = sphi 0, %s123
      %s124 = sphi 0, %s121
      %s125 = sphi 0, %s124
      %s141 = sphi 0, %s125
      %s149 = sphi 0, %s151
      %s152 = sphi 0, %s149
      %s153 = sphi 0, %s152
      %s169 = sphi 0, %s153
    $region4: #{tpu_custom_call.1} parent=1 // loop_header_branch
      %20 = sbr.rel (%p18) target = $region8
    $region5: #{tpu_custom_call.1} parent=1 // loop_body
      %s22 = ssub.s32 %s17, 1
      %s23 = ssub.s32 %s17, 2
      %s30 = sadd.s32 1, %s25
      %p31 = scmp.ge.s32.totalorder %s30, 1
      %s32 = scalar_select %p31, 0, %s30
      %s33 = sadd.s32 1, %s24
      %s34 = scalar_select %p31, %s33, %s24
      %p35 = scmp.ge.s32.totalorder %s34, 2
      %s36 = scalar_select %p35, 0, %s34
      %s37 = ssub.s32 %s24, %s36
      %s38 = ssub.s32 %s25, %s32
      %s39 = sor.u32 %s37, %s38
      %p40 = scmp.eq.s32.totalorder %s39, 0
      %s42 = sadd.s32 %s41, 1
      %s43 = scalar_select %p40, %s41, %s42
      %p46 = pneg %p40
      %p47 = scmp.eq.s32.totalorder %s17, 1
      %p48 = por %p46, %p47
      %p49 = scmp.ne.s32.totalorder %s41, %s44
      %p50 = scmp.eq.s32.totalorder %s17, 0
      %p51 = por %p49, %p50
      %p52 = scmp.ne.s32.totalorder %s41, %s44
      %p53 = scmp.eq.s32.totalorder %s22, 1
      %p54 = por %p52, %p53
      %p55 = scmp.ne.s32.totalorder %s44, %s45
      %p56 = scmp.eq.s32.totalorder %s22, 0
      %p57 = por %p55, %p56
      %p58 = scmp.ne.s32.totalorder %s44, %s45
      %p59 = scmp.eq.s32.totalorder %s23, 1
      %p60 = por %p58, %p59
      %p62 = scmp.ne.s32.totalorder %s45, %s61
      %p63 = scmp.eq.s32.totalorder %s23, 0
      %p64 = por %p62, %p63
      %s65 = ssub.s32 %s24, %s36
      %p66 = scmp.eq.s32.totalorder %s65, 0
      %s68 = sadd.s32 %s67, 1
      %s69 = scalar_select %p66, %s67, %s68
      %p72 = pneg %p66
      %p73 = scmp.eq.s32.totalorder %s17, 1
      %p74 = por %p72, %p73
      %p75 = scmp.ne.s32.totalorder %s67, %s70
      %p76 = scmp.eq.s32.totalorder %s17, 0
      %p77 = por %p75, %p76
      %p78 = scmp.ne.s32.totalorder %s67, %s70
      %p79 = scmp.eq.s32.totalorder %s22, 1
      %p80 = por %p78, %p79
      %p81 = scmp.ne.s32.totalorder %s70, %s71
      %p82 = scmp.eq.s32.totalorder %s22, 0
      %p83 = por %p81, %p82
      %p84 = scmp.ne.s32.totalorder %s70, %s71
      %p85 = scmp.eq.s32.totalorder %s23, 1
      %p86 = por %p84, %p85
      %p88 = scmp.ne.s32.totalorder %s71, %s87
      %p89 = scmp.eq.s32.totalorder %s23, 0
      %p90 = por %p88, %p89
      %s91 = ssub.s32 %s24, %s36
      %p92 = scmp.eq.s32.totalorder %s91, 0
      %s94 = sadd.s32 %s93, 1
      %s95 = scalar_select %p92, %s93, %s94
      %p98 = pneg %p92
      %p99 = scmp.eq.s32.totalorder %s17, 1
      %p100 = por %p98, %p99
      %p101 = scmp.ne.s32.totalorder %s93, %s96
      %p102 = scmp.eq.s32.totalorder %s17, 0
      %p103 = por %p101, %p102
      %p104 = scmp.ne.s32.totalorder %s93, %s96
      %p105 = scmp.eq.s32.totalorder %s22, 1
      %p106 = por %p104, %p105
      %p107 = scmp.ne.s32.totalorder %s96, %s97
      %p108 = scmp.eq.s32.totalorder %s22, 0
      %p109 = por %p107, %p108
      %p110 = scmp.ne.s32.totalorder %s96, %s97
      %p111 = scmp.eq.s32.totalorder %s23, 1
      %p112 = por %p110, %p111
      %p114 = scmp.ne.s32.totalorder %s97, %s113
      %p115 = scmp.eq.s32.totalorder %s23, 0
      %p116 = por %p114, %p115
      %s117 = ssub.s32 %s24, %s36
      %s118 = ssub.s32 %s25, %s32
      %s119 = sor.u32 %s117, %s118
      %p120 = scmp.eq.s32.totalorder %s119, 0
      %s122 = sadd.s32 %s121, 1
      %s123 = scalar_select %p120, %s121, %s122
      %p126 = pneg %p120
      %p127 = scmp.eq.s32.totalorder %s17, 1
      %p128 = por %p126, %p127
      %p129 = scmp.ne.s32.totalorder %s121, %s124
      %p130 = scmp.eq.s32.totalorder %s17, 0
      %p131 = por %p129, %p130
      %p132 = scmp.ne.s32.totalorder %s121, %s124
      %p133 = scmp.eq.s32.totalorder %s22, 1
      %p134 = por %p132, %p133
      %p135 = scmp.ne.s32.totalorder %s124, %s125
      %p136 = scmp.eq.s32.totalorder %s22, 0
      %p137 = por %p135, %p136
      %p138 = scmp.ne.s32.totalorder %s124, %s125
      %p139 = scmp.eq.s32.totalorder %s23, 1
      %p140 = por %p138, %p139
      %p142 = scmp.ne.s32.totalorder %s125, %s141
      %p143 = scmp.eq.s32.totalorder %s23, 0
      %p144 = por %p142, %p143
      %s145 = ssub.s32 %s24, %s36
      %s146 = ssub.s32 %s25, %s32
      %s147 = sor.u32 %s145, %s146
      %p148 = scmp.eq.s32.totalorder %s147, 0
      %s150 = sadd.s32 %s149, 1
      %s151 = scalar_select %p148, %s149, %s150
      %p154 = pneg %p148
      %p155 = scmp.eq.s32.totalorder %s17, 1
      %p156 = por %p154, %p155
      %p157 = scmp.ne.s32.totalorder %s149, %s152
      %p158 = scmp.eq.s32.totalorder %s17, 0
      %p159 = por %p157, %p158
      %p160 = scmp.ne.s32.totalorder %s149, %s152
      %p161 = scmp.eq.s32.totalorder %s22, 1
      %p162 = por %p160, %p161
      %p163 = scmp.ne.s32.totalorder %s152, %s153
      %p164 = scmp.eq.s32.totalorder %s22, 0
      %p165 = por %p163, %p164
      %p166 = scmp.ne.s32.totalorder %s152, %s153
      %p167 = scmp.eq.s32.totalorder %s23, 1
      %p168 = por %p166, %p167
      %p170 = scmp.ne.s32.totalorder %s153, %s169
      %p171 = scmp.eq.s32.totalorder %s23, 0
      %p172 = por %p170, %p171
      %p173 = scmp.le.s32.totalorder 1, %s17
      %p174 = scmp.lt.s32.totalorder %s17, 3
      %p175 = pnand %p173, %p174
      %p176 = pneg %p175
      // Predicated region
      $region9: #{tpu_custom_call.1} parent=5 // pred_check
        _
      $region10: #{tpu_custom_call.1} parent=5 // pred_check_branch
        %178 = sbr.rel (%p175) target = $region12
      $region11: #{tpu_custom_call.1} parent=5 // pred_region
        %s179 = ssub.s32 %s17, 1
      $region12: #{tpu_custom_call.1} parent=5 // pred_fallthru
        _
      %p180 = scmp.lt.s32.totalorder %s17, 2
      // Predicated region
      $region13: #{tpu_custom_call.1} parent=5 // pred_check
        %p181 = pneg %p180
      $region14: #{tpu_custom_call.1} parent=5 // pred_check_branch
        %183 = sbr.rel (%p181) target = $region16
      $region15: #{tpu_custom_call.1} parent=5 // pred_region
        // Predicated region
        $region17: #{tpu_custom_call.1} parent=15 // pred_check
          %p184 = pneg %p51
        $region18: #{tpu_custom_call.1} parent=15 // pred_check_branch
          %186 = sbr.rel (%p184) target = $region20
        $region19: #{tpu_custom_call.1} parent=15 // pred_region
          %p187 = scmp.lt.s32.totalorder %s24, 1
          %s188 = scalar_select %p187, %s24, 1
          %p189 = scmp.lt.s32.totalorder %s25, 0
          %s190 = scalar_select %p189, %s25, 0
          %s191 = sadd.s32 %s190, %s188
          %s192 = smul.addr %s191, 8
          %s193 = scalar_lea.vmem %s0, %s192
        $region20: #{tpu_custom_call.1} parent=15 // pred_fallthru
          _
        // Predicated region
        $region21: #{tpu_custom_call.1} parent=15 // pred_check
          %p194 = pneg %p77
        $region22: #{tpu_custom_call.1} parent=15 // pred_check_branch
          %196 = sbr.rel (%p194) target = $region24
        $region23: #{tpu_custom_call.1} parent=15 // pred_region
          %p197 = scmp.lt.s32.totalorder %s24, 1
          %s198 = scalar_select %p197, %s24, 1
          %s199 = smul.addr %s198, 16
          %s200 = smul.addr %s199, 8
          %s201 = scalar_lea.vmem %s1, %s200
        $region24: #{tpu_custom_call.1} parent=15 // pred_fallthru
          _
        // Predicated region
        $region25: #{tpu_custom_call.1} parent=15 // pred_check
          %p202 = pneg %p103
        $region26: #{tpu_custom_call.1} parent=15 // pred_check_branch
          %204 = sbr.rel (%p202) target = $region28
        $region27: #{tpu_custom_call.1} parent=15 // pred_region
          %p205 = scmp.lt.s32.totalorder %s24, 1
          %s206 = scalar_select %p205, %s24, 1
          %s207 = smul.addr %s206, 16
          %s208 = smul.addr %s207, 8
          %s209 = scalar_lea.vmem %s2, %s208
        $region28: #{tpu_custom_call.1} parent=15 // pred_fallthru
          _
      $region16: #{tpu_custom_call.1} parent=5 // pred_fallthru
        _
      %p210 = scmp.le.s32.totalorder 1, %s17
      %p211 = scmp.lt.s32.totalorder %s17, 3
      %p212 = pnand %p210, %p211
      %p213 = pneg %p212
      // Predicated region
      $region29: #{tpu_custom_call.1} parent=5 // pred_check
        _
      $region30: #{tpu_custom_call.1} parent=5 // pred_check_branch
        %215 = sbr.rel (%p212) target = $region32
      $region31: #{tpu_custom_call.1} parent=5 // pred_region
        %s216 = ssub.s32 %s17, 1
        %p217 = scmp.lt.s32.totalorder %s26, 1
        %s218 = scalar_select %p217, %s26, 1
        %p219 = scmp.lt.s32.totalorder %s27, 0
        %s220 = scalar_select %p219, %s27, 0
        %s221 = sadd.s32 %s220, %s218
        %s222 = smul.addr %s221, 8
        %s223 = scalar_lea.vmem %s0, %s222
        %p224 = pneg %p57
        %p225 = pneg %p54
        %p226 = scmp.lt.s32.totalorder %s26, 1
        %s227 = scalar_select %p226, %s26, 1
        %s228 = smul.addr %s227, 16
        %s229 = smul.addr %s228, 8
        %s230 = scalar_lea.vmem %s1, %s229
        %p231 = pneg %p83
        %p232 = pneg %p80
        %p233 = scmp.lt.s32.totalorder %s26, 1
        %s234 = scalar_select %p233, %s26, 1
        %s235 = smul.addr %s234, 16
        %s236 = smul.addr %s235, 8
        %s237 = scalar_lea.vmem %s2, %s236
        %p238 = pneg %p109
        %p239 = pneg %p106
        %p240 = pneg %p137
        %p241 = pneg %p134
        %s242 = sand.u32 %s124, 1
        %s243 = scalar_lea.sflag [#allocation3], %s242
        %s244 = sand.u32 %s124, 1
        %s245 = smul.addr %s244, 8
        %s246 = scalar_lea.vmem [#allocation2], %s245
        %p247 = pneg %p165
        %p248 = pneg %p162
        %s249 = sand.u32 %s152, 1
        %s250 = scalar_lea.sflag [#allocation5], %s249
        %s251 = sand.u32 %s152, 1
        %s252 = smul.addr %s251, 8
        %s253 = scalar_lea.vmem [#allocation4], %s252
        %p254 = scmp.lt.s32.totalorder %s26, 1
        %s255 = scalar_select %p254, %s26, 1
        %p256 = scmp.lt.s32.totalorder %s27, 0
        %s257 = scalar_select %p256, %s27, 0
        %s258 = sadd.s32 %s257, %s255
        %s259 = smul.addr %s258, 8
        %s260 = scalar_lea.vmem %s0, %s259
        %p261 = scmp.lt.s32.totalorder %s26, 1
        %s262 = scalar_select %p261, %s26, 1
        %s263 = smul.addr %s262, 16
        %s264 = smul.addr %s263, 8
        %s265 = scalar_lea.vmem %s1, %s264
        %p266 = scmp.lt.s32.totalorder %s26, 1
        %s267 = scalar_select %p266, %s26, 1
        %s268 = smul.addr %s267, 16
        %s269 = smul.addr %s268, 8
        %s270 = scalar_lea.vmem %s2, %s269
        %v271 = vld [vmem:[%s260] sm:$0xff]
        %v272 = vld [vmem:[%s265] sm:$0xff]
        %v273 = vld [vmem:[%s265 + $0x8] sm:$0xff]
        %v274 = vld [vmem:[%s265 + $0x10] sm:$0xff]
        %v275 = vld [vmem:[%s265 + $0x18] sm:$0xff]
        %v276 = vld [vmem:[%s265 + $0x20] sm:$0xff]
        %v277 = vld [vmem:[%s265 + $0x28] sm:$0xff]
        %v278 = vld [vmem:[%s265 + $0x30] sm:$0xff]
        %v279 = vld [vmem:[%s265 + $0x38] sm:$0xff]
        %v280 = vld [vmem:[%s265 + $0x40] sm:$0xff]
        %v281 = vld [vmem:[%s265 + $0x48] sm:$0xff]
        %v282 = vld [vmem:[%s265 + $0x50] sm:$0xff]
        %v283 = vld [vmem:[%s265 + $0x58] sm:$0xff]
        %v284 = vld [vmem:[%s265 + $0x60] sm:$0xff]
        %v285 = vld [vmem:[%s265 + $0x68] sm:$0xff]
        %v286 = vld [vmem:[%s265 + $0x70] sm:$0xff]
        %v287 = vld [vmem:[%s265 + $0x78] sm:$0xff]
        %v288 = vld [vmem:[%s270] sm:$0xff]
        %v289 = vld [vmem:[%s270 + $0x8] sm:$0xff]
        %v290 = vld [vmem:[%s270 + $0x10] sm:$0xff]
        %v291 = vld [vmem:[%s270 + $0x18] sm:$0xff]
        %v292 = vld [vmem:[%s270 + $0x20] sm:$0xff]
        %v293 = vld [vmem:[%s270 + $0x28] sm:$0xff]
        %v294 = vld [vmem:[%s270 + $0x30] sm:$0xff]
        %v295 = vld [vmem:[%s270 + $0x38] sm:$0xff]
        %v296 = vld [vmem:[%s270 + $0x40] sm:$0xff]
        %v297 = vld [vmem:[%s270 + $0x48] sm:$0xff]
        %v298 = vld [vmem:[%s270 + $0x50] sm:$0xff]
        %v299 = vld [vmem:[%s270 + $0x58] sm:$0xff]
        %v300 = vld [vmem:[%s270 + $0x60] sm:$0xff]
        %v301 = vld [vmem:[%s270 + $0x68] sm:$0xff]
        %v302 = vld [vmem:[%s270 + $0x70] sm:$0xff]
        %v303 = vld [vmem:[%s270 + $0x78] sm:$0xff]
        %v304 = vmul.f32 %v271, 0.17677669
        %vm305 = vcmask 261120
        %v307 = vsel %vm305, %v304, 0
        %v310 = vsel %vm305, %v272, 0
        %v313 = vsel %vm305, %v273, 0
        %v316 = vsel %vm305, %v274, 0
        %v319 = vsel %vm305, %v275, 0
        %v322 = vsel %vm305, %v276, 0
        %v325 = vsel %vm305, %v277, 0
        %v328 = vsel %vm305, %v278, 0
        %v331 = vsel %vm305, %v279, 0
        %v334 = vsel %vm305, %v280, 0
        %v337 = vsel %vm305, %v281, 0
        %v340 = vsel %vm305, %v282, 0
        %v343 = vsel %vm305, %v283, 0
        %v346 = vsel %vm305, %v284, 0
        %v349 = vsel %vm305, %v285, 0
        %v352 = vsel %vm305, %v286, 0
        %v355 = vsel %vm305, %v287, 0
        %357 = vmatprep.subr.mxu0 0.0
        %358 = vmatpush1.xpose.msra.mxu0 %v355
        %359 = vmatprep.subr.mxu0 0.0
        %360 = vmatpush1.xpose.msra.mxu0 %v352
        %361 = vmatprep.subr.mxu0 0.0
        %362 = vmatpush1.xpose.msra.mxu0 %v349
        %363 = vmatprep.subr.mxu0 0.0
        %364 = vmatpush1.xpose.msra.mxu0 %v346
        %365 = vmatprep.subr.mxu0 0.0
        %366 = vmatpush1.xpose.msra.mxu0 %v343
        %367 = vmatprep.subr.mxu0 0.0
        %368 = vmatpush1.xpose.msra.mxu0 %v340
        %369 = vmatprep.subr.mxu0 0.0
        %370 = vmatpush1.xpose.msra.mxu0 %v337
        %371 = vmatprep.subr.mxu0 0.0
        %372 = vmatpush1.xpose.msra.mxu0 %v334
        %373 = vmatprep.subr.mxu0 0.0
        %374 = vmatpush1.xpose.msra.mxu0 %v331
        %375 = vmatprep.subr.mxu0 0.0
        %376 = vmatpush1.xpose.msra.mxu0 %v328
        %377 = vmatprep.subr.mxu0 0.0
        %378 = vmatpush1.xpose.msra.mxu0 %v325
        %379 = vmatprep.subr.mxu0 0.0
        %380 = vmatpush1.xpose.msra.mxu0 %v322
        %381 = vmatprep.subr.mxu0 0.0
        %382 = vmatpush1.xpose.msra.mxu0 %v319
        %383 = vmatprep.subr.mxu0 0.0
        %384 = vmatpush1.xpose.msra.mxu0 %v316
        %385 = vmatprep.subr.mxu0 0.0
        %386 = vmatpush1.xpose.msra.mxu0 %v313
        %387 = vmatprep.subr.mxu0 0.0
        %388 = vmatpush1.xpose.msra.mxu0 %v310
        %389 = vmatprep.subr.mxu0 0.0
        %390 = vmatpush2.xpose.msra.mxu0 0.0
        %391 = vmatprep.subr.mxu0 0.0
        %392 = vmatpush2.xpose.msra.mxu0 0.0
        %393 = vmatprep.subr.mxu0 0.0
        %394 = vmatpush2.xpose.msra.mxu0 0.0
        %395 = vmatprep.subr.mxu0 0.0
        %396 = vmatpush2.xpose.msra.mxu0 0.0
        %397 = vmatprep.subr.mxu0 0.0
        %398 = vmatpush2.xpose.msra.mxu0 0.0
        %399 = vmatprep.subr.mxu0 0.0
        %400 = vmatpush2.xpose.msra.mxu0 0.0
        %401 = vmatprep.subr.mxu0 0.0
        %402 = vmatpush2.xpose.msra.mxu0 0.0
        %403 = vmatprep.subr.mxu0 0.0
        %404 = vmatpush2.xpose.msra.mxu0 0.0
        %405 = vmatprep.subr.mxu0 0.0
        %406 = vmatpush2.xpose.msra.mxu0 0.0
        %407 = vmatprep.subr.mxu0 0.0
        %408 = vmatpush2.xpose.msra.mxu0 0.0
        %409 = vmatprep.subr.mxu0 0.0
        %410 = vmatpush2.xpose.msra.mxu0 0.0
        %411 = vmatprep.subr.mxu0 0.0
        %412 = vmatpush2.xpose.msra.mxu0 0.0
        %413 = vmatprep.subr.mxu0 0.0
        %414 = vmatpush2.xpose.msra.mxu0 0.0
        %415 = vmatprep.subr.mxu0 0.0
        %416 = vmatpush2.xpose.msra.mxu0 0.0
        %417 = vmatprep.subr.mxu0 0.0
        %418 = vmatpush2.xpose.msra.mxu0 0.0
        %419 = vmatprep.subr.mxu0 0.0
        %420 = vmatpush2.xpose.msra.mxu0 0.0
        %421 = vmatprep.mubr.f32.mxu0 0.0
        %422 = vmatmul.mubr.f32.gmra.mxu0 %v307
        %v423 = vpop.f32.mrf.mxu0
        %v424 = vadd.f32 0.0, %v423
        %v425 = vpop.f32.mrf.mxu0
        %426 = vdwg.mxu0
        %v427 = vlaneseq
        %v428 = vand.u32 %v427, 127
        %vm429 = vcmp.lt.s32.totalorder %v428, 8
        %v430 = vsel %vm429, %v424, -inf
        %431 = vmax.xlane.f32.xlu0 %v430
        %v432 = vpop.xlane.xlu0 %431
        %v433 = vsub.f32 %v430, %v432
        %v434 = vmul.f32 %v433, 1.442695
        %v435 = vpow.pop %v434
        %436 = vadd.xlane.f32.xlu0 %v435
        %v437 = vpop.xlane.xlu0 %436
        %v438 = vrcp.pop %v437
        %v439 = vmul.f32 %v435, %v438
        %440 = vmatprep.subr.mxu0 0.0
        %441 = vmatpush1.msra.mxu0 %v303
        %442 = vmatprep.subr.mxu0 0.0
        %443 = vmatpush1.msra.mxu0 %v302
        %444 = vmatprep.subr.mxu0 0.0
        %445 = vmatpush1.msra.mxu0 %v301
        %446 = vmatprep.subr.mxu0 0.0
        %447 = vmatpush1.msra.mxu0 %v300
        %448 = vmatprep.subr.mxu0 0.0
        %449 = vmatpush1.msra.mxu0 %v299
        %450 = vmatprep.subr.mxu0 0.0
        %451 = vmatpush1.msra.mxu0 %v298
        %452 = vmatprep.subr.mxu0 0.0
        %453 = vmatpush1.msra.mxu0 %v297
        %454 = vmatprep.subr.mxu0 0.0
        %455 = vmatpush1.msra.mxu0 %v296
        %456 = vmatprep.subr.mxu0 0.0
        %457 = vmatpush1.msra.mxu0 %v295
        %458 = vmatprep.subr.mxu0 0.0
        %459 = vmatpush1.msra.mxu0 %v294
        %460 = vmatprep.subr.mxu0 0.0
        %461 = vmatpush1.msra.mxu0 %v293
        %462 = vmatprep.subr.mxu0 0.0
        %463 = vmatpush1.msra.mxu0 %v292
        %464 = vmatprep.subr.mxu0 0.0
        %465 = vmatpush1.msra.mxu0 %v291
        %466 = vmatprep.subr.mxu0 0.0
        %467 = vmatpush1.msra.mxu0 %v290
        %468 = vmatprep.subr.mxu0 0.0
        %469 = vmatpush1.msra.mxu0 %v289
        %470 = vmatprep.subr.mxu0 0.0
        %471 = vmatpush1.msra.mxu0 %v288
        %472 = vmatprep.subr.mxu0 0.0
        %473 = vmatpush2.msra.mxu0 0.0
        %474 = vmatprep.subr.mxu0 0.0
        %475 = vmatpush2.msra.mxu0 0.0
        %476 = vmatprep.subr.mxu0 0.0
        %477 = vmatpush2.msra.mxu0 0.0
        %478 = vmatprep.subr.mxu0 0.0
        %479 = vmatpush2.msra.mxu0 0.0
        %480 = vmatprep.subr.mxu0 0.0
        %481 = vmatpush2.msra.mxu0 0.0
        %482 = vmatprep.subr.mxu0 0.0
        %483 = vmatpush2.msra.mxu0 0.0
        %484 = vmatprep.subr.mxu0 0.0
        %485 = vmatpush2.msra.mxu0 0.0
        %486 = vmatprep.subr.mxu0 0.0
        %487 = vmatpush2.msra.mxu0 0.0
        %488 = vmatprep.subr.mxu0 0.0
        %489 = vmatpush2.msra.mxu0 0.0
        %490 = vmatprep.subr.mxu0 0.0
        %491 = vmatpush2.msra.mxu0 0.0
        %492 = vmatprep.subr.mxu0 0.0
        %493 = vmatpush2.msra.mxu0 0.0
        %494 = vmatprep.subr.mxu0 0.0
        %495 = vmatpush2.msra.mxu0 0.0
        %496 = vmatprep.subr.mxu0 0.0
        %497 = vmatpush2.msra.mxu0 0.0
        %498 = vmatprep.subr.mxu0 0.0
        %499 = vmatpush2.msra.mxu0 0.0
        %500 = vmatprep.subr.mxu0 0.0
        %501 = vmatpush2.msra.mxu0 0.0
        %502 = vmatprep.subr.mxu0 0.0
        %503 = vmatpush2.msra.mxu0 0.0
        %504 = vmatprep.mubr.f32.mxu0 0.0
        %505 = vmatmul.mubr.f32.gmra.mxu0 %v439
        %v506 = vpop.f32.mrf.mxu0
        %v507 = vadd.f32 0.0, %v506
        %v508 = vpop.f32.mrf.mxu0
        %509 = vdwg.mxu0
        %510 = vst [vmem:[%s253] sm:$0xff] %v439
        %511 = vst.msk [vmem:[%s246] sm:$0xff] %vm305, %v507
        %s512 = sand.u32 %s124, 1
        %s513 = scalar_lea.sflag [#allocation3], %s512
        %s514 = sand.u32 %s124, 1
        %s515 = smul.addr %s514, 8
        %s516 = scalar_lea.vmem [#allocation2], %s515
        %s517 = sand.u32 %s152, 1
        %s518 = scalar_lea.sflag [#allocation5], %s517
        %s519 = sand.u32 %s152, 1
        %s520 = smul.addr %s519, 8
        %s521 = scalar_lea.vmem [#allocation4], %s520
        // Predicated region
        $region33: #{tpu_custom_call.1} parent=31 // pred_check
          %p522 = pneg %p134
        $region34: #{tpu_custom_call.1} parent=31 // pred_check_branch
          %524 = sbr.rel (%p522) target = $region36
        $region35: #{tpu_custom_call.1} parent=31 // pred_region
          %s526 = ssub.s32 128, 128
          %527 = vsyncadd %s513, %s526
          %s528 = sadd.s32 %s27, %s26
          %s529 = smul.addr %s528, 128
          %s530 = scalar_lea.hbm %s3, %s529
          %s532 = sshll.u32 %s516, 4
          %s533 = int_to_ptr.vmem [resolvable:$true] %s532
          %535 = dma.vmem_to_hbm [thread:$0]  %s533, 128, %s530, %s513
        $region36: #{tpu_custom_call.1} parent=31 // pred_fallthru
          _
        // Predicated region
        $region37: #{tpu_custom_call.1} parent=31 // pred_check
          %p536 = pneg %p162
        $region38: #{tpu_custom_call.1} parent=31 // pred_check_branch
          %538 = sbr.rel (%p536) target = $region40
        $region39: #{tpu_custom_call.1} parent=31 // pred_region
          %s540 = ssub.s32 128, 128
          %541 = vsyncadd %s518, %s540
          %s542 = sadd.s32 %s27, %s26
          %s543 = smul.addr %s542, 128
          %s544 = scalar_lea.hbm %s4, %s543
          %s546 = sshll.u32 %s521, 4
          %s547 = int_to_ptr.vmem [resolvable:$true] %s546
          %549 = dma.vmem_to_hbm [thread:$0]  %s547, 128, %s544, %s518
        $region40: #{tpu_custom_call.1} parent=31 // pred_fallthru
          _
      $region32: #{tpu_custom_call.1} parent=5 // pred_fallthru
        _
      %p550 = scmp.le.s32.totalorder 2, %s17
      // Predicated region
      $region41: #{tpu_custom_call.1} parent=5 // pred_check
        %p551 = pneg %p550
      $region42: #{tpu_custom_call.1} parent=5 // pred_check_branch
        %553 = sbr.rel (%p551) target = $region44
      $region43: #{tpu_custom_call.1} parent=5 // pred_region
        %s554 = ssub.s32 %s17, 2
        // Predicated region
        $region45: #{tpu_custom_call.1} parent=43 // pred_check
          %p555 = pneg %p140
        $region46: #{tpu_custom_call.1} parent=43 // pred_check_branch
          %557 = sbr.rel (%p555) target = $region48
        $region47: #{tpu_custom_call.1} parent=43 // pred_region
          %s558 = sand.u32 %s125, 1
          %s559 = scalar_lea.sflag [#allocation3], %s558
          %s560 = sand.u32 %s125, 1
          %s561 = smul.addr %s560, 8
          %s562 = scalar_lea.vmem [#allocation2], %s561
          %563 = dma.done %s559, 128
        $region48: #{tpu_custom_call.1} parent=43 // pred_fallthru
          _
        // Predicated region
        $region49: #{tpu_custom_call.1} parent=43 // pred_check
          %p564 = pneg %p168
        $region50: #{tpu_custom_call.1} parent=43 // pred_check_branch
          %566 = sbr.rel (%p564) target = $region52
        $region51: #{tpu_custom_call.1} parent=43 // pred_region
          %s567 = sand.u32 %s153, 1
          %s568 = scalar_lea.sflag [#allocation5], %s567
          %s569 = sand.u32 %s153, 1
          %s570 = smul.addr %s569, 8
          %s571 = scalar_lea.vmem [#allocation4], %s570
          %572 = dma.done %s568, 128
        $region52: #{tpu_custom_call.1} parent=43 // pred_fallthru
          _
      $region44: #{tpu_custom_call.1} parent=5 // pred_fallthru
        _
    $region6: #{tpu_custom_call.1} parent=1 // loop_footer
      %s21 = sadd.s32 1, %s17
    $region7: #{tpu_custom_call.1} parent=1 // loop_footer_branch
      %16 = sbr.rel target = $region3
    $region8: #{tpu_custom_call.1} parent=1 // loop_exit
      _
    %573 = vsyncpa [#allocation3], 1
    %s574 = scalar_lea.sflag [#allocation3], 1
    %575 = vsyncpa %s574, 1
    %576 = vsyncpa [#allocation5], 1
    %s577 = scalar_lea.sflag [#allocation5], 1
    %578 = vsyncpa %s577, 1

</llo_original>
